<compile_context>
chip_gen: v6e
topology: v6e:2x2x1
jax: 0.10.0
libtpu: 0.0.40
codegen_flags: <defaults>
</compile_context>

<pallas_src>
import functools

import jax
import jax.numpy as jnp
from jax.experimental import pallas as pl
from jax.experimental.pallas import tpu as pltpu


def _linear_kernel(x_ref, w_ref, b_ref, o_ref):
    # x_ref: (tm, C) row tile of inputs (streamed)
    # w_ref: (C, K)  pre-transposed weight, resident across all grid steps
    # b_ref: (1, K)  bias row (f32)
    # o_ref: (tm, K) output tile
    acc = jnp.dot(x_ref[...], w_ref[...], preferred_element_type=jnp.float32)
    # Output last-dim K is tiny (< 128) -> masked stores, but output bytes are
    # negligible vs the x stream, so lane-padding K was measured-low-value and skipped.
    o_ref[...] = (acc + b_ref[...]).astype(o_ref.dtype)


def _round_up(x, m):
    return ((x + m - 1) // m) * m


def _pick_row_tile(n_rows, n_cols, n_out, in_dtype, out_dtype, *,
                   target_bytes_per_step, vmem_budget_bytes, max_rows=8192):
    """Choose the per-grid-step row tile (tm). Pure Python, static shapes only."""
    in_item = jnp.dtype(in_dtype).itemsize
    out_item = jnp.dtype(out_dtype).itemsize
    # Sublane packing: 8 rows f32, 16 bf16, 32 int8/fp8. Align to worst of in/out.
    sub = max(8, 32 // in_item, 32 // out_item)

    cp = _round_up(n_cols, 128)   # lane-padded feature dim
    kp = _round_up(n_out, 128)    # lane-padded class dim (K<128 still occupies 128 lanes)

    def vmem_est(t):
        tp = _round_up(t, sub)
        return (2 * tp * cp * in_item                          # double-buffered x tile
                + 2 * tp * kp * out_item                       # double-buffered out tile
                + 2 * _round_up(n_cols, sub) * kp * in_item    # resident weight (2x conservative)
                + 2 * sub * kp * 4)                            # bias row

    # Tiny-N fast path: one block == the whole array (no pipelining overhead and no
    # (8,128) divisibility requirement) -- only when it genuinely fits the budget.
    if n_rows <= 512 and vmem_est(n_rows) <= vmem_budget_bytes:
        return n_rows

    # Size the tile by bytes of x moved per grid step (the dominant HBM stream).
    tm = target_bytes_per_step // max(1, n_cols * in_item)
    tm = max(512, min(tm, max_rows))
    # Medium-N: guarantee at least 2 grid steps so the second TC on v7x gets work.
    half = _round_up((n_rows + 1) // 2, sub)
    tm = min(tm, half)
    tm = max(sub, (tm // sub) * sub)

    # Shrink (padding-aware) until the double-buffered footprint fits the budget.
    while tm > sub and vmem_est(tm) > vmem_budget_bytes:
        tm = max(sub, ((tm // 2) // sub) * sub)
    return tm


@functools.partial(jax.jit, static_argnames=("target_bytes_per_step",
                                             "vmem_budget_bytes",
                                             "vmem_limit_bytes"))
def classifier_1fc_forward(x, weight_t, bias, *,
                           target_bytes_per_step=4 << 20,
                           vmem_budget_bytes=40 << 20,
                           vmem_limit_bytes=48 << 20):
    """Pallas implementation of Classifier_1fc.forward (droprate == 0.0).

    x:        (N, C)  input instances -- streamed in its own dtype (pass bf16 x if the
                      producer already emits bf16; no wrapper-side cast is performed)
    weight_t: (C, K)  PRE-TRANSPOSED nn.Linear weight (torch weight.T, done once at init)
    bias:     (K,)    nn.Linear bias
    returns   (N, K)  in x.dtype
    """
    # TODO(synk): dropout path (droprate != 0.0 in training mode) not implemented;
    # with the module default droprate=0.0 (and in eval mode) dropout is identity,
    # so this matches the PyTorch forward exactly.
    out_dtype = x.dtype
    N, C = x.shape
    Cw, K = weight_t.shape
    assert C == Cw, "weight_t must be (n_channels, n_classes)"

    # Only the tiny (C, K) weight is cast to match x; x itself is NOT pre-cast
    # (a wrapper-side cast would be an un-fused extra HBM round trip).
    w = weight_t.astype(x.dtype)
    b2 = bias.reshape(1, K).astype(jnp.float32)

    tm = _pick_row_tile(
        N, C, K, x.dtype, out_dtype,
        target_bytes_per_step=target_bytes_per_step,
        vmem_budget_bytes=vmem_budget_bytes,
    )
    grid = (pl.cdiv(N, tm),)   # ragged N: Pallas masks the out-of-bounds tail rows

    in_item = jnp.dtype(x.dtype).itemsize
    out_item = jnp.dtype(out_dtype).itemsize
    cost = pl.CostEstimate(
        flops=2 * N * C * K,
        transcendentals=0,
        bytes_accessed=N * C * in_item + C * K * in_item + K * 4 + N * K * out_item,
    )

    return pl.pallas_call(
        _linear_kernel,
        out_shape=jax.ShapeDtypeStruct((N, K), out_dtype),
        grid_spec=pltpu.PrefetchScalarGridSpec(
            num_scalar_prefetch=0,
            grid=grid,
            in_specs=[
                pl.BlockSpec((tm, C), lambda i: (i, 0)),   # streamed row tile of x
                pl.BlockSpec((C, K), lambda i: (0, 0)),    # weight, stays resident
                pl.BlockSpec((1, K), lambda i: (0, 0)),    # bias row, stays resident
            ],
            out_specs=pl.BlockSpec((tm, K), lambda i: (i, 0)),
        ),
        compiler_params=pltpu.CompilerParams(
            dimension_semantics=("parallel",),   # row tiles shard across TCs on v7x
            vmem_limit_bytes=vmem_limit_bytes,   # v5e default scoped VMEM is only 16 MiB
        ),
        cost_estimate=cost,
    )(x, w, b2)


def init_classifier_1fc_params(key, n_channels, n_classes, dtype=jnp.float32):
    """Deterministic init mimicking torch.nn.Linear (uniform +/- 1/sqrt(fan_in)).

    Returns the weight PRE-TRANSPOSED as (n_channels, n_classes) so the forward
    never pays a per-call transpose. (A torch-layout (K, C) checkpoint weight
    should be transposed once at load time.)
    """
    kw, kb = jax.random.split(key)
    bound = 1.0 / jnp.sqrt(jnp.asarray(n_channels, dtype))
    weight_t = jax.random.uniform(kw, (n_channels, n_classes), dtype, -bound, bound)
    bias = jax.random.uniform(kb, (n_classes,), dtype, -bound, bound)
    return weight_t, bias


if __name__ == "__main__":
    key = jax.random.PRNGKey(0)
    k_x1, k_p1, k_x2, k_p2 = jax.random.split(key, 4)

    # Case 1: tiny MIL bag (N=8 instances, 32-dim features, 4 classes).
    # Exercises the single-block fast path (grid=(1,), block == full array).
    N1, C1, K1 = 8, 32, 4
    x1 = jax.random.normal(k_x1, (N1, C1), dtype=jnp.float32)
    w1_t, b1 = init_classifier_1fc_params(k_p1, C1, K1)
    out1 = jax.block_until_ready(classifier_1fc_forward(x1, w1_t, b1))
    ref1 = x1 @ w1_t + b1
    assert out1.shape == (N1, K1)
    assert jnp.allclose(out1, ref1, atol=1e-5, rtol=1e-5), "case 1 mismatch"

    # Case 2: larger, ragged bag (N not a multiple of the tile): exercises the
    # bytes-per-step tiled path with >=2 grid steps and a masked edge block.
    N2, C2, K2 = 1000, 256, 8
    x2 = jax.random.normal(k_x2, (N2, C2), dtype=jnp.float32)
    w2_t, b2 = init_classifier_1fc_params(k_p2, C2, K2)
    out2 = jax.block_until_ready(classifier_1fc_forward(x2, w2_t, b2))
    ref2 = x2 @ w2_t + b2
    assert out2.shape == (N2, K2)
    assert jnp.allclose(out2, ref2, atol=2e-3, rtol=2e-3), "case 2 mismatch"

    # Case 3: x already materialized in bf16 by its producer (recommended pattern;
    # no wrapper-side cast). Kernel streams bf16, accumulates f32 on the MXU.
    x2_bf16 = x2.astype(jnp.bfloat16)
    out3 = jax.block_until_ready(classifier_1fc_forward(x2_bf16, w2_t, b2))
    assert out3.dtype == jnp.bfloat16
    assert jnp.allclose(out3.astype(jnp.float32), ref2, atol=1.5e-1, rtol=1e-1), \
        "case 3 (bf16) mismatch"

    print("KERNEL_OK")
</pallas_src>

<mosaic_0001>
module attributes {stable_mosaic.version = 11 : i64} {
  func.func @_linear_kernel(%arg0: i32, %arg1: memref<8x32xf32, #tpu.memory_space<vmem>>, %arg2: memref<32x4xf32, #tpu.memory_space<vmem>>, %arg3: memref<1x4xf32, #tpu.memory_space<vmem>>, %arg4: memref<8x4xf32, #tpu.memory_space<vmem>>) attributes {dimension_semantics = [#tpu.dimension_semantics<parallel>], iteration_bounds = array<i64: 1>, scalar_prefetch = 0 : i64, scratch_operands = 0 : i64, tpu.core_type = #tpu.core_type<tc>, window_params = [{transform_indices = @transform_0, window_bounds = array<i64: 8, 32>}, {pipeline_mode = #tpu.pipeline_mode<synchronous>, transform_indices = @transform_1, window_bounds = array<i64: 32, 4>}, {pipeline_mode = #tpu.pipeline_mode<synchronous>, transform_indices = @transform_2, window_bounds = array<i64: 1, 4>}, {transform_indices = @transform_3, window_bounds = array<i64: 8, 4>}]} {
    %c0 = arith.constant 0 : index
    %c0_0 = arith.constant 0 : index
    %0 = vector.load %arg1[%c0, %c0_0] : memref<8x32xf32, #tpu.memory_space<vmem>>, vector<8x32xf32>
    %c0_1 = arith.constant 0 : index
    %c0_2 = arith.constant 0 : index
    %1 = vector.load %arg2[%c0_1, %c0_2] : memref<32x4xf32, #tpu.memory_space<vmem>>, vector<32x4xf32>
    %cst = arith.constant dense<0.000000e+00> : vector<8x4xf32>
    %2 = tpu.matmul %0, %1, %cst {dimension_numbers = #tpu.dot_dimension_numbers<[1], [0], [0], [1], [0, 0, 1, 1], [], []>} : vector<8x32xf32>, vector<32x4xf32>, vector<8x4xf32> -> vector<8x4xf32>
    %c0_3 = arith.constant 0 : index
    %c0_4 = arith.constant 0 : index
    %3 = vector.load %arg3[%c0_3, %c0_4] : memref<1x4xf32, #tpu.memory_space<vmem>>, vector<1x4xf32>
    %4 = vector.broadcast %3 : vector<1x4xf32> to vector<8x4xf32>
    %5 = arith.addf %2, %4 : vector<8x4xf32>
    %c0_5 = arith.constant 0 : index
    %c0_6 = arith.constant 0 : index
    %6 = vector.load %arg4[%c0_5, %c0_6] : memref<8x4xf32, #tpu.memory_space<vmem>>, vector<8x4xf32>
    tpu.vector_store %arg4[%c0_5, %c0_6], %5 {strides = array<i32>} : memref<8x4xf32, #tpu.memory_space<vmem>>, vector<8x4xf32>,
    return
  }
  func.func @transform_0(%arg0: i32) -> (i32, i32) {
    %c0_i32 = arith.constant 0 : i32
    %c0_i32_0 = arith.constant 0 : i32
    return %arg0, %c0_i32 : i32, i32
  }
  func.func @transform_1(%arg0: i32) -> (i32, i32) {
    %c0_i32 = arith.constant 0 : i32
    %c0_i32_0 = arith.constant 0 : i32
    %c0_i32_1 = arith.constant 0 : i32
    return %c0_i32, %c0_i32_0 : i32, i32
  }
  func.func @transform_2(%arg0: i32) -> (i32, i32) {
    %c0_i32 = arith.constant 0 : i32
    %c0_i32_0 = arith.constant 0 : i32
    %c0_i32_1 = arith.constant 0 : i32
    return %c0_i32, %c0_i32_0 : i32, i32
  }
  func.func @transform_3(%arg0: i32) -> (i32, i32) {
    %c0_i32 = arith.constant 0 : i32
    %c0_i32_0 = arith.constant 0 : i32
    return %arg0, %c0_i32 : i32, i32
  }
}

</mosaic_0001>

<llo_original>
// kernel: classifier_1fc_forward.1
$region0: #{classifier_1fc_forward.1}
  #allocation0 [shape = 'u32[]', space=smem, size = 0x4, offset = 0x4, fixed_abs, tag = 'smem constant byte address 0x4 - core index']
  #allocation1 [shape = 'u32[144,128]{1,0:T(1,128)}', space=vmem, size = 0x12000, scoped, tag = 'internal scratch']
  %s0 = inlined_call_operand.vmem [shape: f32[8,32], index: 0, kind: input, shape index: {}]
  %s1 = inlined_call_operand.vmem [shape: f32[32,4], index: 1, kind: input, shape index: {}]
  %s2 = inlined_call_operand.vmem [shape: f32[1,4], index: 2, kind: input, shape index: {}]
  %s3 = inlined_call_operand.vmem [shape: f32[8,4], index: 3, kind: output, shape index: {}]
  %s4 = sld [smem:[#allocation0]]
  $region22: #{classifier_1fc_forward.1} parent=0
    _
  %s6 = ssub.s32 1, %s4
  %s7 = scalar_select 0, %s6, %s4
  // Predicated region
  $region2: #{classifier_1fc_forward.1} parent=0 // pred_check
    _
  $region3: #{classifier_1fc_forward.1} parent=0 // pred_check_branch
    %9 = sbr.rel (0) target = $region5
  $region4: #{classifier_1fc_forward.1} parent=0 // pred_region
    _
  $region5: #{classifier_1fc_forward.1} parent=0 // pred_fallthru
    _
  // Predicated region
  $region6: #{classifier_1fc_forward.1} parent=0 // pred_check
    _
  $region7: #{classifier_1fc_forward.1} parent=0 // pred_check_branch
    %11 = sbr.rel (0) target = $region9
  $region8: #{classifier_1fc_forward.1} parent=0 // pred_region
    _
  $region9: #{classifier_1fc_forward.1} parent=0 // pred_fallthru
    _
  // Predicated region
  $region10: #{classifier_1fc_forward.1} parent=0 // pred_check
    _
  $region11: #{classifier_1fc_forward.1} parent=0 // pred_check_branch
    %13 = sbr.rel (0) target = $region13
  $region12: #{classifier_1fc_forward.1} parent=0 // pred_region
    _
  $region13: #{classifier_1fc_forward.1} parent=0 // pred_fallthru
    _
  %v14 = vld [vmem:[%s0] sm:$0xff]
  %v15 = vld [vmem:[%s1] sm:$0xff]
  %v16 = vld [vmem:[%s1 + $0x8] sm:$0xff]
  %v17 = vld [vmem:[%s1 + $0x10] sm:$0xff]
  %v18 = vld [vmem:[%s1 + $0x18] sm:$0xff]
  %v19 = vld [vmem:[%s2] sm:$0x1]
  %v21 = vlaneseq
  %v22 = vshrl.u32 %v21, 7
  %v23 = vsub.s32 0, %v22
  %v24 = vrot.slane %v19, %v23
  %vm26 = vcmask 261120
  %v28 = vsel %vm26, %v14, 0
  %30 = vmatprep.subr.mxu0 0.0
  %31 = vmatpush1.msra.mxu0 0.0
  %32 = vmatprep.subr.mxu0 0.0
  %33 = vmatpush1.msra.mxu0 0.0
  %34 = vmatprep.subr.mxu0 0.0
  %35 = vmatpush1.msra.mxu0 0.0
  %36 = vmatprep.subr.mxu0 0.0
  %37 = vmatpush1.msra.mxu0 0.0
  %38 = vmatprep.subr.mxu0 0.0
  %39 = vmatpush1.msra.mxu0 0.0
  %40 = vmatprep.subr.mxu0 0.0
  %41 = vmatpush1.msra.mxu0 0.0
  %42 = vmatprep.subr.mxu0 0.0
  %43 = vmatpush1.msra.mxu0 0.0
  %44 = vmatprep.subr.mxu0 0.0
  %45 = vmatpush1.msra.mxu0 0.0
  %46 = vmatprep.subr.mxu0 0.0
  %47 = vmatpush1.msra.mxu0 0.0
  %48 = vmatprep.subr.mxu0 0.0
  %49 = vmatpush1.msra.mxu0 0.0
  %50 = vmatprep.subr.mxu0 0.0
  %51 = vmatpush1.msra.mxu0 0.0
  %52 = vmatprep.subr.mxu0 0.0
  %53 = vmatpush1.msra.mxu0 0.0
  %54 = vmatprep.subr.mxu0 0.0
  %55 = vmatpush1.msra.mxu0 %v18
  %56 = vmatprep.subr.mxu0 0.0
  %57 = vmatpush1.msra.mxu0 %v17
  %58 = vmatprep.subr.mxu0 0.0
  %59 = vmatpush1.msra.mxu0 %v16
  %60 = vmatprep.subr.mxu0 0.0
  %61 = vmatpush1.msra.mxu0 %v15
  %62 = vmatprep.subr.mxu0 0.0
  %63 = vmatpush2.msra.mxu0 0.0
  %64 = vmatprep.subr.mxu0 0.0
  %65 = vmatpush2.msra.mxu0 0.0
  %66 = vmatprep.subr.mxu0 0.0
  %67 = vmatpush2.msra.mxu0 0.0
  %68 = vmatprep.subr.mxu0 0.0
  %69 = vmatpush2.msra.mxu0 0.0
  %70 = vmatprep.subr.mxu0 0.0
  %71 = vmatpush2.msra.mxu0 0.0
  %72 = vmatprep.subr.mxu0 0.0
  %73 = vmatpush2.msra.mxu0 0.0
  %74 = vmatprep.subr.mxu0 0.0
  %75 = vmatpush2.msra.mxu0 0.0
  %76 = vmatprep.subr.mxu0 0.0
  %77 = vmatpush2.msra.mxu0 0.0
  %78 = vmatprep.subr.mxu0 0.0
  %79 = vmatpush2.msra.mxu0 0.0
  %80 = vmatprep.subr.mxu0 0.0
  %81 = vmatpush2.msra.mxu0 0.0
  %82 = vmatprep.subr.mxu0 0.0
  %83 = vmatpush2.msra.mxu0 0.0
  %84 = vmatprep.subr.mxu0 0.0
  %85 = vmatpush2.msra.mxu0 0.0
  %86 = vmatprep.subr.mxu0 0.0
  %87 = vmatpush2.msra.mxu0 0.0
  %88 = vmatprep.subr.mxu0 0.0
  %89 = vmatpush2.msra.mxu0 0.0
  %90 = vmatprep.subr.mxu0 0.0
  %91 = vmatpush2.msra.mxu0 0.0
  %92 = vmatprep.subr.mxu0 0.0
  %93 = vmatpush2.msra.mxu0 0.0
  %94 = vmatprep.mubr.f32.mxu0 0.0
  %95 = vmatmul.mubr.f32.gmra.mxu0 %v28
  %v96 = vpop.f32.mrf.mxu0
  %v97 = vadd.f32 %v24, %v96
  %v98 = vpop.f32.mrf.mxu0
  %99 = vdwg.mxu0
  %vm100 = vcmask 31744
  %101 = vst.msk [vmem:[%s3] sm:$0xff] %vm100, %v97
  // Predicated region
  $region14: #{classifier_1fc_forward.1} parent=0 // pred_check
    _
  $region15: #{classifier_1fc_forward.1} parent=0 // pred_check_branch
    %103 = sbr.rel (0) target = $region17
  $region16: #{classifier_1fc_forward.1} parent=0 // pred_region
    _
  $region17: #{classifier_1fc_forward.1} parent=0 // pred_fallthru
    _
  // Predicated region
  $region18: #{classifier_1fc_forward.1} parent=0 // pred_check
    _
  $region19: #{classifier_1fc_forward.1} parent=0 // pred_check_branch
    %105 = sbr.rel (0) target = $region21
  $region20: #{classifier_1fc_forward.1} parent=0 // pred_region
    _
  $region21: #{classifier_1fc_forward.1} parent=0 // pred_fallthru
    _

</llo_original>
